<compile_context>
chip_gen: v6e
topology: v6e:2x2x1
jax: 0.10.0
libtpu: 0.0.40
codegen_flags: <defaults>
</compile_context>

<pallas_src>
import jax
import jax.numpy as jnp
from jax.experimental import pallas as pl
from jax.experimental.pallas import tpu as pltpu


# ----------------------------------------------------------------------------
# Kernel: fused 1x1 conv + BN scale/bias (f32 epilogue) + ReLU, NCHW layout.
# ----------------------------------------------------------------------------
def _conv1x1_bn_relu_kernel(x_ref, w_ref, s_ref, b_ref, o_ref):
    # x_ref: (bN, C_in, tL)   pixel columns of bN images
    # w_ref: (C_out, C_in)    1x1 conv weight (unscaled, activation dtype)
    # s_ref: (C_out, 1)       BN scale  (f32), broadcast over lanes
    # b_ref: (C_out, 1)       BN bias   (f32), broadcast over lanes
    # o_ref: (bN, C_out, tL)
    w = w_ref[...]
    s = s_ref[...]
    b = b_ref[...]
    for i in range(x_ref.shape[0]):          # static unroll; weight stays resident
        y = jnp.dot(w, x_ref[i], preferred_element_type=jnp.float32)
        y = y * s + b
        o_ref[i] = jnp.maximum(y, 0.0).astype(o_ref.dtype)


def _round_up(x, m):
    return ((x + m - 1) // m) * m


def _choose_block(N, L, C_in, C_out, itemsize, vmem_budget_bytes=24 << 20):
    """Pick (bN, tile_l): lane columns per grid step.

    The op is HBM-bound, so each step should move as many bytes as the VMEM
    budget allows (amortizes the ~0.35us/step overhead).  Budget is kept at
    ~24 MiB so the double-buffered footprint fits v7x's smaller VMEM without
    spilling; vmem_limit_bytes is raised by the caller for v5e.
    """
    per_col = 2 * (C_in + C_out) * itemsize                 # dbl-buffered x + out, per column
    resident = 2 * C_out * C_in * itemsize + 4 * C_out * 4  # weight + scale + bias buffers
    max_cols = max(128, (vmem_budget_bytes - resident) // per_col)
    target_cols = 16384 if itemsize <= 2 else 8192
    target_cols = int(min(target_cols, max_cols))

    if L >= target_cols:
        bn = 1
        tile_l = max(128, (target_cols // 128) * 128)
    else:
        tile_l = L                                           # full dim → always legal, lane-dense
        bn = max(1, min(N, target_cols // max(L, 1)))        # pack images into the block

    # Ensure >=2 parallel grid steps (v7x two-TC sharding) only when the work is
    # big enough that the extra step overhead is negligible.
    steps = pl.cdiv(N, bn) * pl.cdiv(L, tile_l)
    if steps < 2 and N * L >= 2048:
        if bn >= 2:
            bn = (bn + 1) // 2
        elif L >= 256:
            tile_l = _round_up((L + 1) // 2, 128)
    return bn, tile_l


def conv1x1_bn_relu_nchw(x_ncl, w, scale_col, bias_col, *, bn, tile_l, vmem_limit_bytes):
    """x_ncl: (N, C_in, L); w: (C_out, C_in); scale_col/bias_col: (C_out, 1) f32."""
    N, C_in, L = x_ncl.shape
    C_out = w.shape[0]
    itemsize = x_ncl.dtype.itemsize

    cost = pl.CostEstimate(
        flops=2 * N * L * C_in * C_out,
        transcendentals=0,
        bytes_accessed=(N * C_in * L * itemsize             # read x
                        + C_out * C_in * w.dtype.itemsize   # read w
                        + 2 * C_out * 4                     # read scale + bias
                        + N * C_out * L * itemsize),        # write y
    )

    return pl.pallas_call(
        _conv1x1_bn_relu_kernel,
        out_shape=jax.ShapeDtypeStruct((N, C_out, L), x_ncl.dtype),
        grid_spec=pltpu.PrefetchScalarGridSpec(
            num_scalar_prefetch=0,
            grid=(pl.cdiv(N, bn), pl.cdiv(L, tile_l)),
            in_specs=[
                pl.BlockSpec((bn, C_in, tile_l), lambda n, l: (n, 0, l)),
                pl.BlockSpec((C_out, C_in), lambda n, l: (0, 0)),
                pl.BlockSpec((C_out, 1), lambda n, l: (0, 0)),
                pl.BlockSpec((C_out, 1), lambda n, l: (0, 0)),
            ],
            out_specs=pl.BlockSpec((bn, C_out, tile_l), lambda n, l: (n, 0, l)),
        ),
        compiler_params=pltpu.CompilerParams(
            dimension_semantics=("parallel", "parallel"),
            vmem_limit_bytes=vmem_limit_bytes,
        ),
        cost_estimate=cost,
    )(x_ncl, w, scale_col, bias_col)


# ----------------------------------------------------------------------------
# Module wrapper (eval-mode BN), mirrors ConvBNReLU(in_nc, out_nc, ks=1).
# ----------------------------------------------------------------------------
class ContextPallas:
    """Pallas equivalent of FANet's context 1x1 ConvBNReLU head (eval-mode BN)."""

    def __init__(self, in_nc=128, out_nc=128, key=jax.random.PRNGKey(0)):
        k_w, k_g, k_b = jax.random.split(key, 3)
        # kaiming_normal_(a=1) on (out, in, 1, 1): std = sqrt(2/(1+a^2)/fan_in)
        fan_in = in_nc
        std = (2.0 / (1.0 + 1.0 ** 2) / fan_in) ** 0.5
        self.weight = std * jax.random.normal(k_w, (out_nc, in_nc, 1, 1), jnp.float32)
        # BatchNorm2d params (eval mode, deterministic synthetic stats)
        self.gamma = 1.0 + 0.1 * jax.random.normal(k_g, (out_nc,), jnp.float32)
        self.beta = 0.1 * jax.random.normal(k_b, (out_nc,), jnp.float32)
        self.running_mean = jnp.zeros((out_nc,), jnp.float32)
        self.running_var = jnp.ones((out_nc,), jnp.float32)
        self.eps = 1e-5
        self.in_nc = in_nc
        self.out_nc = out_nc

    def __call__(self, x_nchw):
        N, C, H, W = x_nchw.shape
        assert C == self.in_nc

        # Eval-mode BN as per-channel scale/bias, applied in the f32 epilogue
        # (NOT folded into the possibly-bf16 weight → better accuracy, free under DMA).
        scale = self.gamma / jnp.sqrt(self.running_var + self.eps)       # (C_out,)
        bias = self.beta - self.running_mean * scale                     # (C_out,)
        w = self.weight[:, :, 0, 0].astype(x_nchw.dtype)                 # (C_out, C_in)
        scale_col = scale.reshape(-1, 1).astype(jnp.float32)
        bias_col = bias.reshape(-1, 1).astype(jnp.float32)

        # NCHW stays NCHW: only free reshapes, no HBM transpose passes.
        L = H * W
        x_ncl = x_nchw.reshape(N, C, L)

        # Lane-dense guard: never emit an output block with last dim < 128.
        L_run = L
        if L < 128:
            L_run = 128
            x_ncl = jnp.pad(x_ncl, ((0, 0), (0, 0), (0, L_run - L)))

        itemsize = x_ncl.dtype.itemsize
        bn, tile_l = _choose_block(N, L_run, C, self.out_nc, itemsize)

        # Explicit VMEM limit: covers the double-buffered footprint with headroom,
        # above v5e's 16 MiB default but safely below v7x's 64 MiB physical.
        footprint = (2 * bn * tile_l * (C + self.out_nc) * itemsize
                     + 2 * self.out_nc * C * itemsize + 4 * self.out_nc * 4)
        vmem_limit = int(min(max(footprint + (4 << 20), 32 << 20), 48 << 20))

        y = conv1x1_bn_relu_nchw(x_ncl, w, scale_col, bias_col,
                                 bn=bn, tile_l=tile_l,
                                 vmem_limit_bytes=vmem_limit)
        if L_run != L:
            y = y[:, :, :L]
        return y.reshape(N, self.out_nc, H, W)


def _reference(model, x):
    # Plain-JAX reference, module math order: conv -> BN scale/bias -> ReLU.
    scale = model.gamma / jnp.sqrt(model.running_var + model.eps)
    bias = model.beta - model.running_mean * scale
    w = model.weight[:, :, 0, 0]
    ref = jnp.einsum("oc,nchw->nohw", w, x, precision=jax.lax.Precision.HIGHEST)
    ref = ref * scale[None, :, None, None] + bias[None, :, None, None]
    return jnp.maximum(ref, 0.0)


if __name__ == "__main__":
    key = jax.random.PRNGKey(0)
    k_in, k_in2, k_mod = jax.random.split(key, 3)

    N, C_in, C_out, H, W = 2, 128, 128, 16, 16
    x = jax.random.normal(k_in, (N, C_in, H, W), jnp.float32)

    model = ContextPallas(in_nc=C_in, out_nc=C_out, key=k_mod)

    # f32 path (matches PyTorch semantics).
    out = jax.block_until_ready(model(x))
    ref = _reference(model, x)
    assert out.shape == (N, C_out, H, W)
    assert jnp.allclose(out, ref, atol=1e-3, rtol=1e-3)

    # bf16 streaming path (what a bf16 backbone would feed): half the HBM traffic,
    # f32 accumulation + f32 BN epilogue inside the kernel, bf16 output.
    out_bf16 = jax.block_until_ready(model(x.astype(jnp.bfloat16)))
    assert out_bf16.dtype == jnp.bfloat16
    assert out_bf16.shape == (N, C_out, H, W)
    assert jnp.allclose(out_bf16.astype(jnp.float32), ref, atol=7.5e-2, rtol=7.5e-2)

    # Tiny feature map (L < 128): exercises the lane-dense pad/slice path.
    Hs = Ws = 8
    x_small = jax.random.normal(k_in2, (N, C_in, Hs, Ws), jnp.float32)
    out_small = jax.block_until_ready(model(x_small))
    ref_small = _reference(model, x_small)
    assert out_small.shape == (N, C_out, Hs, Ws)
    assert jnp.allclose(out_small, ref_small, atol=1e-3, rtol=1e-3)

    print("KERNEL_OK")
</pallas_src>

<mosaic_0001>
module attributes {stable_mosaic.version = 11 : i64} {
  func.func @_conv1x1_bn_relu_kernel(%arg0: i32, %arg1: i32, %arg2: memref<2x128x256xf32, #tpu.memory_space<vmem>>, %arg3: memref<128x128xf32, #tpu.memory_space<vmem>>, %arg4: memref<128x1xf32, #tpu.memory_space<vmem>>, %arg5: memref<128x1xf32, #tpu.memory_space<vmem>>, %arg6: memref<2x128x256xf32, #tpu.memory_space<vmem>>) attributes {dimension_semantics = [#tpu.dimension_semantics<parallel>, #tpu.dimension_semantics<parallel>], iteration_bounds = array<i64: 1, 1>, scalar_prefetch = 0 : i64, scratch_operands = 0 : i64, tpu.core_type = #tpu.core_type<tc>, window_params = [{transform_indices = @transform_0, window_bounds = array<i64: 2, 128, 256>}, {pipeline_mode = #tpu.pipeline_mode<synchronous>, transform_indices = @transform_1, window_bounds = array<i64: 128, 128>}, {pipeline_mode = #tpu.pipeline_mode<synchronous>, transform_indices = @transform_2, window_bounds = array<i64: 128, 1>}, {pipeline_mode = #tpu.pipeline_mode<synchronous>, transform_indices = @transform_3, window_bounds = array<i64: 128, 1>}, {transform_indices = @transform_4, window_bounds = array<i64: 2, 128, 256>}]} {
    %c0 = arith.constant 0 : index
    %c0_0 = arith.constant 0 : index
    %0 = vector.load %arg3[%c0, %c0_0] : memref<128x128xf32, #tpu.memory_space<vmem>>, vector<128x128xf32>
    %c0_1 = arith.constant 0 : index
    %c0_2 = arith.constant 0 : index
    %1 = vector.load %arg4[%c0_1, %c0_2] : memref<128x1xf32, #tpu.memory_space<vmem>>, vector<128x1xf32>
    %c0_3 = arith.constant 0 : index
    %c0_4 = arith.constant 0 : index
    %2 = vector.load %arg5[%c0_3, %c0_4] : memref<128x1xf32, #tpu.memory_space<vmem>>, vector<128x1xf32>
    %c0_5 = arith.constant 0 : index
    %c0_6 = arith.constant 0 : index
    %c0_7 = arith.constant 0 : index
    %3 = vector.load %arg2[%c0_5, %c0_6, %c0_7] : memref<2x128x256xf32, #tpu.memory_space<vmem>>, vector<1x128x256xf32>
    %4 = vector.shape_cast %3 : vector<1x128x256xf32> to vector<128x256xf32>
    %cst = arith.constant dense<0.000000e+00> : vector<128x256xf32>
    %5 = tpu.matmul %0, %4, %cst {dimension_numbers = #tpu.dot_dimension_numbers<[1], [0], [0], [1], [0, 0, 1, 1], [], []>} : vector<128x128xf32>, vector<128x256xf32>, vector<128x256xf32> -> vector<128x256xf32>
    %6 = vector.broadcast %1 : vector<128x1xf32> to vector<128x256xf32>
    %7 = arith.mulf %5, %6 : vector<128x256xf32>
    %8 = vector.broadcast %2 : vector<128x1xf32> to vector<128x256xf32>
    %9 = arith.addf %7, %8 : vector<128x256xf32>
    %cst_8 = arith.constant 0.000000e+00 : f32
    %10 = vector.broadcast %cst_8 : f32 to vector<128x256xf32>
    %11 = arith.maximumf %9, %10 : vector<128x256xf32>
    %c0_9 = arith.constant 0 : index
    %c0_10 = arith.constant 0 : index
    %c0_11 = arith.constant 0 : index
    %12 = vector.load %arg6[%c0_9, %c0_10, %c0_11] : memref<2x128x256xf32, #tpu.memory_space<vmem>>, vector<1x128x256xf32>
    %13 = vector.shape_cast %12 : vector<1x128x256xf32> to vector<128x256xf32>
    %14 = vector.shape_cast %11 : vector<128x256xf32> to vector<1x128x256xf32>
    tpu.vector_store %arg6[%c0_9, %c0_10, %c0_11], %14 {strides = array<i32>} : memref<2x128x256xf32, #tpu.memory_space<vmem>>, vector<1x128x256xf32>,
    %c1 = arith.constant 1 : index
    %c0_12 = arith.constant 0 : index
    %c0_13 = arith.constant 0 : index
    %15 = vector.load %arg2[%c1, %c0_12, %c0_13] : memref<2x128x256xf32, #tpu.memory_space<vmem>>, vector<1x128x256xf32>
    %16 = vector.shape_cast %15 : vector<1x128x256xf32> to vector<128x256xf32>
    %cst_14 = arith.constant dense<0.000000e+00> : vector<128x256xf32>
    %17 = tpu.matmul %0, %16, %cst_14 {dimension_numbers = #tpu.dot_dimension_numbers<[1], [0], [0], [1], [0, 0, 1, 1], [], []>} : vector<128x128xf32>, vector<128x256xf32>, vector<128x256xf32> -> vector<128x256xf32>
    %18 = vector.broadcast %1 : vector<128x1xf32> to vector<128x256xf32>
    %19 = arith.mulf %17, %18 : vector<128x256xf32>
    %20 = vector.broadcast %2 : vector<128x1xf32> to vector<128x256xf32>
    %21 = arith.addf %19, %20 : vector<128x256xf32>
    %cst_15 = arith.constant 0.000000e+00 : f32
    %22 = vector.broadcast %cst_15 : f32 to vector<128x256xf32>
    %23 = arith.maximumf %21, %22 : vector<128x256xf32>
    %c1_16 = arith.constant 1 : index
    %c0_17 = arith.constant 0 : index
    %c0_18 = arith.constant 0 : index
    %24 = vector.load %arg6[%c1_16, %c0_17, %c0_18] : memref<2x128x256xf32, #tpu.memory_space<vmem>>, vector<1x128x256xf32>
    %25 = vector.shape_cast %24 : vector<1x128x256xf32> to vector<128x256xf32>
    %26 = vector.shape_cast %23 : vector<128x256xf32> to vector<1x128x256xf32>
    tpu.vector_store %arg6[%c1_16, %c0_17, %c0_18], %26 {strides = array<i32>} : memref<2x128x256xf32, #tpu.memory_space<vmem>>, vector<1x128x256xf32>,
    return
  }
  func.func @transform_0(%arg0: i32, %arg1: i32) -> (i32, i32, i32) {
    %c0_i32 = arith.constant 0 : i32
    %c0_i32_0 = arith.constant 0 : i32
    return %arg0, %c0_i32, %arg1 : i32, i32, i32
  }
  func.func @transform_1(%arg0: i32, %arg1: i32) -> (i32, i32) {
    %c0_i32 = arith.constant 0 : i32
    %c0_i32_0 = arith.constant 0 : i32
    %c0_i32_1 = arith.constant 0 : i32
    return %c0_i32, %c0_i32_0 : i32, i32
  }
  func.func @transform_2(%arg0: i32, %arg1: i32) -> (i32, i32) {
    %c0_i32 = arith.constant 0 : i32
    %c0_i32_0 = arith.constant 0 : i32
    %c0_i32_1 = arith.constant 0 : i32
    return %c0_i32, %c0_i32_0 : i32, i32
  }
  func.func @transform_3(%arg0: i32, %arg1: i32) -> (i32, i32) {
    %c0_i32 = arith.constant 0 : i32
    %c0_i32_0 = arith.constant 0 : i32
    %c0_i32_1 = arith.constant 0 : i32
    return %c0_i32, %c0_i32_0 : i32, i32
  }
  func.func @transform_4(%arg0: i32, %arg1: i32) -> (i32, i32, i32) {
    %c0_i32 = arith.constant 0 : i32
    %c0_i32_0 = arith.constant 0 : i32
    return %arg0, %c0_i32, %arg1 : i32, i32, i32
  }
}

</mosaic_0001>

<llo_original>
// kernel: tpu_custom_call.1
$region0: #{tpu_custom_call.1}
  #allocation0 [shape = 'u32[]', space=smem, size = 0x4, offset = 0x4, fixed_abs, tag = 'smem constant byte address 0x4 - core index']
  #allocation1 [shape = 'u32[144,128]{1,0:T(1,128)}', space=vmem, size = 0x12000, scoped, tag = 'internal scratch']
  %s0 = inlined_call_operand.hbm [shape: f32[2,128,256], index: 0, kind: input, shape index: {}]
  %s1 = inlined_call_operand.vmem [shape: f32[128,128], index: 1, kind: input, shape index: {}]
  %s2 = inlined_call_operand.vmem [shape: f32[128,1], index: 2, kind: input, shape index: {}]
  %s3 = inlined_call_operand.vmem [shape: f32[128,1], index: 3, kind: input, shape index: {}]
  %s4 = inlined_call_operand.hbm [shape: f32[2,128,256], index: 4, kind: output, shape index: {}]
  %s5 = sld [smem:[#allocation0]]
  $region30: #{tpu_custom_call.1} parent=0
    _
  %s7 = ssub.s32 1, %s5
  %s8 = scalar_select 0, %s7, %s5
  $region1: #{tpu_custom_call.1} parent=0
    #allocation2 [shape = 'u8[262144]{0}', space=vmem, size = 0x40000, scoped, tag = 'input window, operand 0, single buffered']
    #allocation3 [shape = 's32[1]{0}', space=sflag, size = 0x4, scoped, tag = 'scoped memory for tpu_custom_call.1']
    #allocation4 [shape = 's32[1]{0}', space=sflag, size = 0x4, scoped, tag = 'scoped memory for tpu_custom_call.1']
    #allocation5 [shape = 'u8[262144]{0}', space=vmem, size = 0x40000, scoped, tag = 'output window, operand 0, single buffered']
    %9 = vsyncpa [#allocation3], 0
    %10 = vsyncpa [#allocation4], 0
    // Predicated region
    $region2: #{tpu_custom_call.1} parent=1 // pred_check
      _
    $region3: #{tpu_custom_call.1} parent=1 // pred_check_branch
      %12 = sbr.rel (0) target = $region5
    $region4: #{tpu_custom_call.1} parent=1 // pred_region
      %s14 = ssub.s32 8192, 8192
      %15 = vsyncadd [#allocation3], %s14
      %s16 = sshll.u32 [#allocation2], 4
      %s17 = int_to_ptr.vmem [resolvable:$true] %s16
      %22 = dma.hbm_to_vmem [thread:$0]  %s0, 8192, %s17, [#allocation3], 256, 256, 16
    $region5: #{tpu_custom_call.1} parent=1 // pred_fallthru
      _
    // Predicated region
    $region6: #{tpu_custom_call.1} parent=1 // pred_check
      _
    $region7: #{tpu_custom_call.1} parent=1 // pred_check_branch
      %24 = sbr.rel (0) target = $region9
    $region8: #{tpu_custom_call.1} parent=1 // pred_region
      _
    $region9: #{tpu_custom_call.1} parent=1 // pred_fallthru
      _
    // Predicated region
    $region10: #{tpu_custom_call.1} parent=1 // pred_check
      _
    $region11: #{tpu_custom_call.1} parent=1 // pred_check_branch
      %26 = sbr.rel (0) target = $region13
    $region12: #{tpu_custom_call.1} parent=1 // pred_region
      _
    $region13: #{tpu_custom_call.1} parent=1 // pred_fallthru
      _
    // Predicated region
    $region14: #{tpu_custom_call.1} parent=1 // pred_check
      _
    $region15: #{tpu_custom_call.1} parent=1 // pred_check_branch
      %28 = sbr.rel (0) target = $region17
    $region16: #{tpu_custom_call.1} parent=1 // pred_region
      _
    $region17: #{tpu_custom_call.1} parent=1 // pred_fallthru
      _
    // Predicated region
    $region18: #{tpu_custom_call.1} parent=1 // pred_check
      _
    $region19: #{tpu_custom_call.1} parent=1 // pred_check_branch
      %30 = sbr.rel (0) target = $region21
    $region20: #{tpu_custom_call.1} parent=1 // pred_region
      %31 = dma.done [#allocation3], 8192
    $region21: #{tpu_custom_call.1} parent=1 // pred_fallthru
      _
    %v32 = vld [vmem:[%s1] sm:$0xff]
    %v33 = vld [vmem:[%s1 + $0x8] sm:$0xff]
    %v34 = vld [vmem:[%s1 + $0x10] sm:$0xff]
    %v35 = vld [vmem:[%s1 + $0x18] sm:$0xff]
    %v36 = vld [vmem:[%s1 + $0x20] sm:$0xff]
    %v37 = vld [vmem:[%s1 + $0x28] sm:$0xff]
    %v38 = vld [vmem:[%s1 + $0x30] sm:$0xff]
    %v39 = vld [vmem:[%s1 + $0x38] sm:$0xff]
    %v40 = vld [vmem:[%s1 + $0x40] sm:$0xff]
    %v41 = vld [vmem:[%s1 + $0x48] sm:$0xff]
    %v42 = vld [vmem:[%s1 + $0x50] sm:$0xff]
    %v43 = vld [vmem:[%s1 + $0x58] sm:$0xff]
    %v44 = vld [vmem:[%s1 + $0x60] sm:$0xff]
    %v45 = vld [vmem:[%s1 + $0x68] sm:$0xff]
    %v46 = vld [vmem:[%s1 + $0x70] sm:$0xff]
    %v47 = vld [vmem:[%s1 + $0x78] sm:$0xff]
    %v48 = vld [vmem:[%s2] sm:$0xff]
    %v49 = vld [vmem:[%s2 + $0x8] sm:$0xff]
    %v50 = vld [vmem:[%s2 + $0x10] sm:$0xff]
    %v51 = vld [vmem:[%s2 + $0x18] sm:$0xff]
    %v52 = vld [vmem:[%s2 + $0x20] sm:$0xff]
    %v53 = vld [vmem:[%s2 + $0x28] sm:$0xff]
    %v54 = vld [vmem:[%s2 + $0x30] sm:$0xff]
    %v55 = vld [vmem:[%s2 + $0x38] sm:$0xff]
    %v56 = vld [vmem:[%s2 + $0x40] sm:$0xff]
    %v57 = vld [vmem:[%s2 + $0x48] sm:$0xff]
    %v58 = vld [vmem:[%s2 + $0x50] sm:$0xff]
    %v59 = vld [vmem:[%s2 + $0x58] sm:$0xff]
    %v60 = vld [vmem:[%s2 + $0x60] sm:$0xff]
    %v61 = vld [vmem:[%s2 + $0x68] sm:$0xff]
    %v62 = vld [vmem:[%s2 + $0x70] sm:$0xff]
    %v63 = vld [vmem:[%s2 + $0x78] sm:$0xff]
    %v64 = vld [vmem:[%s3] sm:$0xff]
    %v65 = vld [vmem:[%s3 + $0x8] sm:$0xff]
    %v66 = vld [vmem:[%s3 + $0x10] sm:$0xff]
    %v67 = vld [vmem:[%s3 + $0x18] sm:$0xff]
    %v68 = vld [vmem:[%s3 + $0x20] sm:$0xff]
    %v69 = vld [vmem:[%s3 + $0x28] sm:$0xff]
    %v70 = vld [vmem:[%s3 + $0x30] sm:$0xff]
    %v71 = vld [vmem:[%s3 + $0x38] sm:$0xff]
    %v72 = vld [vmem:[%s3 + $0x40] sm:$0xff]
    %v73 = vld [vmem:[%s3 + $0x48] sm:$0xff]
    %v74 = vld [vmem:[%s3 + $0x50] sm:$0xff]
    %v75 = vld [vmem:[%s3 + $0x58] sm:$0xff]
    %v76 = vld [vmem:[%s3 + $0x60] sm:$0xff]
    %v77 = vld [vmem:[%s3 + $0x68] sm:$0xff]
    %v78 = vld [vmem:[%s3 + $0x70] sm:$0xff]
    %v79 = vld [vmem:[%s3 + $0x78] sm:$0xff]
    %v80 = vld [vmem:[#allocation2] sm:$0xff]
    %v81 = vld [vmem:[#allocation2 + $0x8] sm:$0xff]
    %v82 = vld [vmem:[#allocation2 + $0x10] sm:$0xff]
    %v83 = vld [vmem:[#allocation2 + $0x18] sm:$0xff]
    %v84 = vld [vmem:[#allocation2 + $0x20] sm:$0xff]
    %v85 = vld [vmem:[#allocation2 + $0x28] sm:$0xff]
    %v86 = vld [vmem:[#allocation2 + $0x30] sm:$0xff]
    %v87 = vld [vmem:[#allocation2 + $0x38] sm:$0xff]
    %v88 = vld [vmem:[#allocation2 + $0x40] sm:$0xff]
    %v89 = vld [vmem:[#allocation2 + $0x48] sm:$0xff]
    %v90 = vld [vmem:[#allocation2 + $0x50] sm:$0xff]
    %v91 = vld [vmem:[#allocation2 + $0x58] sm:$0xff]
    %v92 = vld [vmem:[#allocation2 + $0x60] sm:$0xff]
    %v93 = vld [vmem:[#allocation2 + $0x68] sm:$0xff]
    %v94 = vld [vmem:[#allocation2 + $0x70] sm:$0xff]
    %v95 = vld [vmem:[#allocation2 + $0x78] sm:$0xff]
    %v96 = vld [vmem:[#allocation2 + $0x80] sm:$0xff]
    %v97 = vld [vmem:[#allocation2 + $0x88] sm:$0xff]
    %v98 = vld [vmem:[#allocation2 + $0x90] sm:$0xff]
    %v99 = vld [vmem:[#allocation2 + $0x98] sm:$0xff]
    %v100 = vld [vmem:[#allocation2 + $0xa0] sm:$0xff]
    %v101 = vld [vmem:[#allocation2 + $0xa8] sm:$0xff]
    %v102 = vld [vmem:[#allocation2 + $0xb0] sm:$0xff]
    %v103 = vld [vmem:[#allocation2 + $0xb8] sm:$0xff]
    %v104 = vld [vmem:[#allocation2 + $0xc0] sm:$0xff]
    %v105 = vld [vmem:[#allocation2 + $0xc8] sm:$0xff]
    %v106 = vld [vmem:[#allocation2 + $0xd0] sm:$0xff]
    %v107 = vld [vmem:[#allocation2 + $0xd8] sm:$0xff]
    %v108 = vld [vmem:[#allocation2 + $0xe0] sm:$0xff]
    %v109 = vld [vmem:[#allocation2 + $0xe8] sm:$0xff]
    %v110 = vld [vmem:[#allocation2 + $0xf0] sm:$0xff]
    %v111 = vld [vmem:[#allocation2 + $0xf8] sm:$0xff]
    %112 = vmatprep.subr.mxu0 %v111
    %113 = vmatpush1.msra.mxu0 %v110
    %114 = vmatprep.subr.mxu0 %v109
    %115 = vmatpush1.msra.mxu0 %v108
    %116 = vmatprep.subr.mxu0 %v107
    %117 = vmatpush1.msra.mxu0 %v106
    %118 = vmatprep.subr.mxu0 %v105
    %119 = vmatpush1.msra.mxu0 %v104
    %120 = vmatprep.subr.mxu0 %v103
    %121 = vmatpush1.msra.mxu0 %v102
    %122 = vmatprep.subr.mxu0 %v101
    %123 = vmatpush1.msra.mxu0 %v100
    %124 = vmatprep.subr.mxu0 %v99
    %125 = vmatpush1.msra.mxu0 %v98
    %126 = vmatprep.subr.mxu0 %v97
    %127 = vmatpush1.msra.mxu0 %v96
    %128 = vmatprep.subr.mxu0 %v95
    %129 = vmatpush1.msra.mxu0 %v94
    %130 = vmatprep.subr.mxu0 %v93
    %131 = vmatpush1.msra.mxu0 %v92
    %132 = vmatprep.subr.mxu0 %v91
    %133 = vmatpush1.msra.mxu0 %v90
    %134 = vmatprep.subr.mxu0 %v89
    %135 = vmatpush1.msra.mxu0 %v88
    %136 = vmatprep.subr.mxu0 %v87
    %137 = vmatpush1.msra.mxu0 %v86
    %138 = vmatprep.subr.mxu0 %v85
    %139 = vmatpush1.msra.mxu0 %v84
    %140 = vmatprep.subr.mxu0 %v83
    %141 = vmatpush1.msra.mxu0 %v82
    %142 = vmatprep.subr.mxu0 %v81
    %143 = vmatpush1.msra.mxu0 %v80
    %144 = vmatprep.subr.mxu0 0.0
    %145 = vmatpush2.msra.mxu0 0.0
    %146 = vmatprep.subr.mxu0 0.0
    %147 = vmatpush2.msra.mxu0 0.0
    %148 = vmatprep.subr.mxu0 0.0
    %149 = vmatpush2.msra.mxu0 0.0
    %150 = vmatprep.subr.mxu0 0.0
    %151 = vmatpush2.msra.mxu0 0.0
    %152 = vmatprep.subr.mxu0 0.0
    %153 = vmatpush2.msra.mxu0 0.0
    %154 = vmatprep.subr.mxu0 0.0
    %155 = vmatpush2.msra.mxu0 0.0
    %156 = vmatprep.subr.mxu0 0.0
    %157 = vmatpush2.msra.mxu0 0.0
    %158 = vmatprep.subr.mxu0 0.0
    %159 = vmatpush2.msra.mxu0 0.0
    %160 = vmatprep.subr.mxu0 0.0
    %161 = vmatpush2.msra.mxu0 0.0
    %162 = vmatprep.subr.mxu0 0.0
    %163 = vmatpush2.msra.mxu0 0.0
    %164 = vmatprep.subr.mxu0 0.0
    %165 = vmatpush2.msra.mxu0 0.0
    %166 = vmatprep.subr.mxu0 0.0
    %167 = vmatpush2.msra.mxu0 0.0
    %168 = vmatprep.subr.mxu0 0.0
    %169 = vmatpush2.msra.mxu0 0.0
    %170 = vmatprep.subr.mxu0 0.0
    %171 = vmatpush2.msra.mxu0 0.0
    %172 = vmatprep.subr.mxu0 0.0
    %173 = vmatpush2.msra.mxu0 0.0
    %174 = vmatprep.subr.mxu0 0.0
    %175 = vmatpush2.msra.mxu0 0.0
    %176 = vmatprep.mubr.f32.mxu0 0.0
    %177 = vmatmul.mubr.f32.gmra.mxu0 %v32
    %v178 = vpop.f32.mrf.mxu0
    %v179 = vadd.f32 0.0, %v178
    %v180 = vpop.f32.mrf.mxu0
    %v181 = vadd.f32 0.0, %v180
    %182 = vmatprep.mubr.f32.mxu0 0.0
    %183 = vmatmul.mubr.f32.gmra.mxu0 %v33
    %v184 = vpop.f32.mrf.mxu0
    %v185 = vadd.f32 0.0, %v184
    %v186 = vpop.f32.mrf.mxu0
    %v187 = vadd.f32 0.0, %v186
    %188 = vmatprep.mubr.f32.mxu0 0.0
    %189 = vmatmul.mubr.f32.gmra.mxu0 %v34
    %v190 = vpop.f32.mrf.mxu0
    %v191 = vadd.f32 0.0, %v190
    %v192 = vpop.f32.mrf.mxu0
    %v193 = vadd.f32 0.0, %v192
    %194 = vmatprep.mubr.f32.mxu0 0.0
    %195 = vmatmul.mubr.f32.gmra.mxu0 %v35
    %v196 = vpop.f32.mrf.mxu0
    %v197 = vadd.f32 0.0, %v196
    %v198 = vpop.f32.mrf.mxu0
    %v199 = vadd.f32 0.0, %v198
    %200 = vmatprep.mubr.f32.mxu0 0.0
    %201 = vmatmul.mubr.f32.gmra.mxu0 %v36
    %v202 = vpop.f32.mrf.mxu0
    %v203 = vadd.f32 0.0, %v202
    %v204 = vpop.f32.mrf.mxu0
    %v205 = vadd.f32 0.0, %v204
    %206 = vmatprep.mubr.f32.mxu0 0.0
    %207 = vmatmul.mubr.f32.gmra.mxu0 %v37
    %v208 = vpop.f32.mrf.mxu0
    %v209 = vadd.f32 0.0, %v208
    %v210 = vpop.f32.mrf.mxu0
    %v211 = vadd.f32 0.0, %v210
    %212 = vmatprep.mubr.f32.mxu0 0.0
    %213 = vmatmul.mubr.f32.gmra.mxu0 %v38
    %v214 = vpop.f32.mrf.mxu0
    %v215 = vadd.f32 0.0, %v214
    %v216 = vpop.f32.mrf.mxu0
    %v217 = vadd.f32 0.0, %v216
    %218 = vmatprep.mubr.f32.mxu0 0.0
    %219 = vmatmul.mubr.f32.gmra.mxu0 %v39
    %v220 = vpop.f32.mrf.mxu0
    %v221 = vadd.f32 0.0, %v220
    %v222 = vpop.f32.mrf.mxu0
    %v223 = vadd.f32 0.0, %v222
    %224 = vmatprep.mubr.f32.mxu0 0.0
    %225 = vmatmul.mubr.f32.gmra.mxu0 %v40
    %v226 = vpop.f32.mrf.mxu0
    %v227 = vadd.f32 0.0, %v226
    %v228 = vpop.f32.mrf.mxu0
    %v229 = vadd.f32 0.0, %v228
    %230 = vmatprep.mubr.f32.mxu0 0.0
    %231 = vmatmul.mubr.f32.gmra.mxu0 %v41
    %v232 = vpop.f32.mrf.mxu0
    %v233 = vadd.f32 0.0, %v232
    %v234 = vpop.f32.mrf.mxu0
    %v235 = vadd.f32 0.0, %v234
    %236 = vmatprep.mubr.f32.mxu0 0.0
    %237 = vmatmul.mubr.f32.gmra.mxu0 %v42
    %v238 = vpop.f32.mrf.mxu0
    %v239 = vadd.f32 0.0, %v238
    %v240 = vpop.f32.mrf.mxu0
    %v241 = vadd.f32 0.0, %v240
    %242 = vmatprep.mubr.f32.mxu0 0.0
    %243 = vmatmul.mubr.f32.gmra.mxu0 %v43
    %v244 = vpop.f32.mrf.mxu0
    %v245 = vadd.f32 0.0, %v244
    %v246 = vpop.f32.mrf.mxu0
    %v247 = vadd.f32 0.0, %v246
    %248 = vmatprep.mubr.f32.mxu0 0.0
    %249 = vmatmul.mubr.f32.gmra.mxu0 %v44
    %v250 = vpop.f32.mrf.mxu0
    %v251 = vadd.f32 0.0, %v250
    %v252 = vpop.f32.mrf.mxu0
    %v253 = vadd.f32 0.0, %v252
    %254 = vmatprep.mubr.f32.mxu0 0.0
    %255 = vmatmul.mubr.f32.gmra.mxu0 %v45
    %v256 = vpop.f32.mrf.mxu0
    %v257 = vadd.f32 0.0, %v256
    %v258 = vpop.f32.mrf.mxu0
    %v259 = vadd.f32 0.0, %v258
    %260 = vmatprep.mubr.f32.mxu0 0.0
    %261 = vmatmul.mubr.f32.gmra.mxu0 %v46
    %v262 = vpop.f32.mrf.mxu0
    %v263 = vadd.f32 0.0, %v262
    %v264 = vpop.f32.mrf.mxu0
    %v265 = vadd.f32 0.0, %v264
    %266 = vmatprep.mubr.f32.mxu0 0.0
    %267 = vmatmul.mubr.f32.gmra.mxu0 %v47
    %v268 = vpop.f32.mrf.mxu0
    %v269 = vadd.f32 0.0, %v268
    %v270 = vpop.f32.mrf.mxu0
    %v271 = vadd.f32 0.0, %v270
    %272 = vdwg.mxu0
    %274 = vset.pattern.permute.xlu0 0
    %275 = vperm.xlu0 %274, %v48
    %v276 = vpop.permute.xlu0 %275
    %279 = vset.pattern.permute.xlu0 0
    %280 = vperm.xlu0 %279, %v49
    %v281 = vpop.permute.xlu0 %280
    %284 = vset.pattern.permute.xlu0 0
    %285 = vperm.xlu0 %284, %v50
    %v286 = vpop.permute.xlu0 %285
    %289 = vset.pattern.permute.xlu0 0
    %290 = vperm.xlu0 %289, %v51
    %v291 = vpop.permute.xlu0 %290
    %294 = vset.pattern.permute.xlu0 0
    %295 = vperm.xlu0 %294, %v52
    %v296 = vpop.permute.xlu0 %295
    %299 = vset.pattern.permute.xlu0 0
    %300 = vperm.xlu0 %299, %v53
    %v301 = vpop.permute.xlu0 %300
    %304 = vset.pattern.permute.xlu0 0
    %305 = vperm.xlu0 %304, %v54
    %v306 = vpop.permute.xlu0 %305
    %309 = vset.pattern.permute.xlu0 0
    %310 = vperm.xlu0 %309, %v55
    %v311 = vpop.permute.xlu0 %310
    %314 = vset.pattern.permute.xlu0 0
    %315 = vperm.xlu0 %314, %v56
    %v316 = vpop.permute.xlu0 %315
    %319 = vset.pattern.permute.xlu0 0
    %320 = vperm.xlu0 %319, %v57
    %v321 = vpop.permute.xlu0 %320
    %324 = vset.pattern.permute.xlu0 0
    %325 = vperm.xlu0 %324, %v58
    %v326 = vpop.permute.xlu0 %325
    %329 = vset.pattern.permute.xlu0 0
    %330 = vperm.xlu0 %329, %v59
    %v331 = vpop.permute.xlu0 %330
    %334 = vset.pattern.permute.xlu0 0
    %335 = vperm.xlu0 %334, %v60
    %v336 = vpop.permute.xlu0 %335
    %339 = vset.pattern.permute.xlu0 0
    %340 = vperm.xlu0 %339, %v61
    %v341 = vpop.permute.xlu0 %340
    %344 = vset.pattern.permute.xlu0 0
    %345 = vperm.xlu0 %344, %v62
    %v346 = vpop.permute.xlu0 %345
    %349 = vset.pattern.permute.xlu0 0
    %350 = vperm.xlu0 %349, %v63
    %v351 = vpop.permute.xlu0 %350
    %v353 = vmul.f32 %v179, %v276
    %v354 = vmul.f32 %v181, %v276
    %v355 = vmul.f32 %v185, %v281
    %v356 = vmul.f32 %v187, %v281
    %v357 = vmul.f32 %v191, %v286
    %v358 = vmul.f32 %v193, %v286
    %v359 = vmul.f32 %v197, %v291
    %v360 = vmul.f32 %v199, %v291
    %v361 = vmul.f32 %v203, %v296
    %v362 = vmul.f32 %v205, %v296
    %v363 = vmul.f32 %v209, %v301
    %v364 = vmul.f32 %v211, %v301
    %v365 = vmul.f32 %v215, %v306
    %v366 = vmul.f32 %v217, %v306
    %v367 = vmul.f32 %v221, %v311
    %v368 = vmul.f32 %v223, %v311
    %v369 = vmul.f32 %v227, %v316
    %v370 = vmul.f32 %v229, %v316
    %v371 = vmul.f32 %v233, %v321
    %v372 = vmul.f32 %v235, %v321
    %v373 = vmul.f32 %v239, %v326
    %v374 = vmul.f32 %v241, %v326
    %v375 = vmul.f32 %v245, %v331
    %v376 = vmul.f32 %v247, %v331
    %v377 = vmul.f32 %v251, %v336
    %v378 = vmul.f32 %v253, %v336
    %v379 = vmul.f32 %v257, %v341
    %v380 = vmul.f32 %v259, %v341
    %v381 = vmul.f32 %v263, %v346
    %v382 = vmul.f32 %v265, %v346
    %v383 = vmul.f32 %v269, %v351
    %v384 = vmul.f32 %v271, %v351
    %386 = vset.pattern.permute.xlu0 0
    %387 = vperm.xlu0 %386, %v64
    %v388 = vpop.permute.xlu0 %387
    %391 = vset.pattern.permute.xlu0 0
    %392 = vperm.xlu0 %391, %v65
    %v393 = vpop.permute.xlu0 %392
    %396 = vset.pattern.permute.xlu0 0
    %397 = vperm.xlu0 %396, %v66
    %v398 = vpop.permute.xlu0 %397
    %401 = vset.pattern.permute.xlu0 0
    %402 = vperm.xlu0 %401, %v67
    %v403 = vpop.permute.xlu0 %402
    %406 = vset.pattern.permute.xlu0 0
    %407 = vperm.xlu0 %406, %v68
    %v408 = vpop.permute.xlu0 %407
    %411 = vset.pattern.permute.xlu0 0
    %412 = vperm.xlu0 %411, %v69
    %v413 = vpop.permute.xlu0 %412
    %416 = vset.pattern.permute.xlu0 0
    %417 = vperm.xlu0 %416, %v70
    %v418 = vpop.permute.xlu0 %417
    %421 = vset.pattern.permute.xlu0 0
    %422 = vperm.xlu0 %421, %v71
    %v423 = vpop.permute.xlu0 %422
    %426 = vset.pattern.permute.xlu0 0
    %427 = vperm.xlu0 %426, %v72
    %v428 = vpop.permute.xlu0 %427
    %431 = vset.pattern.permute.xlu0 0
    %432 = vperm.xlu0 %431, %v73
    %v433 = vpop.permute.xlu0 %432
    %436 = vset.pattern.permute.xlu0 0
    %437 = vperm.xlu0 %436, %v74
    %v438 = vpop.permute.xlu0 %437
    %441 = vset.pattern.permute.xlu0 0
    %442 = vperm.xlu0 %441, %v75
    %v443 = vpop.permute.xlu0 %442
    %446 = vset.pattern.permute.xlu0 0
    %447 = vperm.xlu0 %446, %v76
    %v448 = vpop.permute.xlu0 %447
    %451 = vset.pattern.permute.xlu0 0
    %452 = vperm.xlu0 %451, %v77
    %v453 = vpop.permute.xlu0 %452
    %456 = vset.pattern.permute.xlu0 0
    %457 = vperm.xlu0 %456, %v78
    %v458 = vpop.permute.xlu0 %457
    %461 = vset.pattern.permute.xlu0 0
    %462 = vperm.xlu0 %461, %v79
    %v463 = vpop.permute.xlu0 %462
    %v465 = vadd.f32 %v353, %v388
    %v466 = vadd.f32 %v354, %v388
    %v467 = vadd.f32 %v355, %v393
    %v468 = vadd.f32 %v356, %v393
    %v469 = vadd.f32 %v357, %v398
    %v470 = vadd.f32 %v358, %v398
    %v471 = vadd.f32 %v359, %v403
    %v472 = vadd.f32 %v360, %v403
    %v473 = vadd.f32 %v361, %v408
    %v474 = vadd.f32 %v362, %v408
    %v475 = vadd.f32 %v363, %v413
    %v476 = vadd.f32 %v364, %v413
    %v477 = vadd.f32 %v365, %v418
    %v478 = vadd.f32 %v366, %v418
    %v479 = vadd.f32 %v367, %v423
    %v480 = vadd.f32 %v368, %v423
    %v481 = vadd.f32 %v369, %v428
    %v482 = vadd.f32 %v370, %v428
    %v483 = vadd.f32 %v371, %v433
    %v484 = vadd.f32 %v372, %v433
    %v485 = vadd.f32 %v373, %v438
    %v486 = vadd.f32 %v374, %v438
    %v487 = vadd.f32 %v375, %v443
    %v488 = vadd.f32 %v376, %v443
    %v489 = vadd.f32 %v377, %v448
    %v490 = vadd.f32 %v378, %v448
    %v491 = vadd.f32 %v379, %v453
    %v492 = vadd.f32 %v380, %v453
    %v493 = vadd.f32 %v381, %v458
    %v494 = vadd.f32 %v382, %v458
    %v495 = vadd.f32 %v383, %v463
    %v496 = vadd.f32 %v384, %v463
    %v497 = vmax.f32 %v465, 0.0
    %v498 = vmax.f32 %v466, 0.0
    %v499 = vmax.f32 %v467, 0.0
    %v500 = vmax.f32 %v468, 0.0
    %v501 = vmax.f32 %v469, 0.0
    %v502 = vmax.f32 %v470, 0.0
    %v503 = vmax.f32 %v471, 0.0
    %v504 = vmax.f32 %v472, 0.0
    %v505 = vmax.f32 %v473, 0.0
    %v506 = vmax.f32 %v474, 0.0
    %v507 = vmax.f32 %v475, 0.0
    %v508 = vmax.f32 %v476, 0.0
    %v509 = vmax.f32 %v477, 0.0
    %v510 = vmax.f32 %v478, 0.0
    %v511 = vmax.f32 %v479, 0.0
    %v512 = vmax.f32 %v480, 0.0
    %v513 = vmax.f32 %v481, 0.0
    %v514 = vmax.f32 %v482, 0.0
    %v515 = vmax.f32 %v483, 0.0
    %v516 = vmax.f32 %v484, 0.0
    %v517 = vmax.f32 %v485, 0.0
    %v518 = vmax.f32 %v486, 0.0
    %v519 = vmax.f32 %v487, 0.0
    %v520 = vmax.f32 %v488, 0.0
    %v521 = vmax.f32 %v489, 0.0
    %v522 = vmax.f32 %v490, 0.0
    %v523 = vmax.f32 %v491, 0.0
    %v524 = vmax.f32 %v492, 0.0
    %v525 = vmax.f32 %v493, 0.0
    %v526 = vmax.f32 %v494, 0.0
    %v527 = vmax.f32 %v495, 0.0
    %v528 = vmax.f32 %v496, 0.0
    %529 = vst [vmem:[#allocation5] sm:$0xff] %v497
    %530 = vst [vmem:[#allocation5 + $0x8] sm:$0xff] %v498
    %531 = vst [vmem:[#allocation5 + $0x10] sm:$0xff] %v499
    %532 = vst [vmem:[#allocation5 + $0x18] sm:$0xff] %v500
    %533 = vst [vmem:[#allocation5 + $0x20] sm:$0xff] %v501
    %534 = vst [vmem:[#allocation5 + $0x28] sm:$0xff] %v502
    %535 = vst [vmem:[#allocation5 + $0x30] sm:$0xff] %v503
    %536 = vst [vmem:[#allocation5 + $0x38] sm:$0xff] %v504
    %537 = vst [vmem:[#allocation5 + $0x40] sm:$0xff] %v505
    %538 = vst [vmem:[#allocation5 + $0x48] sm:$0xff] %v506
    %539 = vst [vmem:[#allocation5 + $0x50] sm:$0xff] %v507
    %540 = vst [vmem:[#allocation5 + $0x58] sm:$0xff] %v508
    %541 = vst [vmem:[#allocation5 + $0x60] sm:$0xff] %v509
    %542 = vst [vmem:[#allocation5 + $0x68] sm:$0xff] %v510
    %543 = vst [vmem:[#allocation5 + $0x70] sm:$0xff] %v511
    %544 = vst [vmem:[#allocation5 + $0x78] sm:$0xff] %v512
    %545 = vst [vmem:[#allocation5 + $0x80] sm:$0xff] %v513
    %546 = vst [vmem:[#allocation5 + $0x88] sm:$0xff] %v514
    %547 = vst [vmem:[#allocation5 + $0x90] sm:$0xff] %v515
    %548 = vst [vmem:[#allocation5 + $0x98] sm:$0xff] %v516
    %549 = vst [vmem:[#allocation5 + $0xa0] sm:$0xff] %v517
    %550 = vst [vmem:[#allocation5 + $0xa8] sm:$0xff] %v518
    %551 = vst [vmem:[#allocation5 + $0xb0] sm:$0xff] %v519
    %552 = vst [vmem:[#allocation5 + $0xb8] sm:$0xff] %v520
    %553 = vst [vmem:[#allocation5 + $0xc0] sm:$0xff] %v521
    %554 = vst [vmem:[#allocation5 + $0xc8] sm:$0xff] %v522
    %555 = vst [vmem:[#allocation5 + $0xd0] sm:$0xff] %v523
    %556 = vst [vmem:[#allocation5 + $0xd8] sm:$0xff] %v524
    %557 = vst [vmem:[#allocation5 + $0xe0] sm:$0xff] %v525
    %558 = vst [vmem:[#allocation5 + $0xe8] sm:$0xff] %v526
    %559 = vst [vmem:[#allocation5 + $0xf0] sm:$0xff] %v527
    %560 = vst [vmem:[#allocation5 + $0xf8] sm:$0xff] %v528
    %s561 = scalar_lea.vmem [#allocation2], 256
    %v562 = vld [vmem:[%s561] sm:$0xff]
    %v563 = vld [vmem:[%s561 + $0x8] sm:$0xff]
    %v564 = vld [vmem:[%s561 + $0x10] sm:$0xff]
    %v565 = vld [vmem:[%s561 + $0x18] sm:$0xff]
    %v566 = vld [vmem:[%s561 + $0x20] sm:$0xff]
    %v567 = vld [vmem:[%s561 + $0x28] sm:$0xff]
    %v568 = vld [vmem:[%s561 + $0x30] sm:$0xff]
    %v569 = vld [vmem:[%s561 + $0x38] sm:$0xff]
    %v570 = vld [vmem:[%s561 + $0x40] sm:$0xff]
    %v571 = vld [vmem:[%s561 + $0x48] sm:$0xff]
    %v572 = vld [vmem:[%s561 + $0x50] sm:$0xff]
    %v573 = vld [vmem:[%s561 + $0x58] sm:$0xff]
    %v574 = vld [vmem:[%s561 + $0x60] sm:$0xff]
    %v575 = vld [vmem:[%s561 + $0x68] sm:$0xff]
    %v576 = vld [vmem:[%s561 + $0x70] sm:$0xff]
    %v577 = vld [vmem:[%s561 + $0x78] sm:$0xff]
    %v578 = vld [vmem:[%s561 + $0x80] sm:$0xff]
    %v579 = vld [vmem:[%s561 + $0x88] sm:$0xff]
    %v580 = vld [vmem:[%s561 + $0x90] sm:$0xff]
    %v581 = vld [vmem:[%s561 + $0x98] sm:$0xff]
    %v582 = vld [vmem:[%s561 + $0xa0] sm:$0xff]
    %v583 = vld [vmem:[%s561 + $0xa8] sm:$0xff]
    %v584 = vld [vmem:[%s561 + $0xb0] sm:$0xff]
    %v585 = vld [vmem:[%s561 + $0xb8] sm:$0xff]
    %v586 = vld [vmem:[%s561 + $0xc0] sm:$0xff]
    %v587 = vld [vmem:[%s561 + $0xc8] sm:$0xff]
    %v588 = vld [vmem:[%s561 + $0xd0] sm:$0xff]
    %v589 = vld [vmem:[%s561 + $0xd8] sm:$0xff]
    %v590 = vld [vmem:[%s561 + $0xe0] sm:$0xff]
    %v591 = vld [vmem:[%s561 + $0xe8] sm:$0xff]
    %v592 = vld [vmem:[%s561 + $0xf0] sm:$0xff]
    %v593 = vld [vmem:[%s561 + $0xf8] sm:$0xff]
    %594 = vmatprep.subr.mxu0 %v593
    %595 = vmatpush1.msra.mxu0 %v592
    %596 = vmatprep.subr.mxu0 %v591
    %597 = vmatpush1.msra.mxu0 %v590
    %598 = vmatprep.subr.mxu0 %v589
    %599 = vmatpush1.msra.mxu0 %v588
    %600 = vmatprep.subr.mxu0 %v587
    %601 = vmatpush1.msra.mxu0 %v586
    %602 = vmatprep.subr.mxu0 %v585
    %603 = vmatpush1.msra.mxu0 %v584
    %604 = vmatprep.subr.mxu0 %v583
    %605 = vmatpush1.msra.mxu0 %v582
    %606 = vmatprep.subr.mxu0 %v581
    %607 = vmatpush1.msra.mxu0 %v580
    %608 = vmatprep.subr.mxu0 %v579
    %609 = vmatpush1.msra.mxu0 %v578
    %610 = vmatprep.subr.mxu0 %v577
    %611 = vmatpush1.msra.mxu0 %v576
    %612 = vmatprep.subr.mxu0 %v575
    %613 = vmatpush1.msra.mxu0 %v574
    %614 = vmatprep.subr.mxu0 %v573
    %615 = vmatpush1.msra.mxu0 %v572
    %616 = vmatprep.subr.mxu0 %v571
    %617 = vmatpush1.msra.mxu0 %v570
    %618 = vmatprep.subr.mxu0 %v569
    %619 = vmatpush1.msra.mxu0 %v568
    %620 = vmatprep.subr.mxu0 %v567
    %621 = vmatpush1.msra.mxu0 %v566
    %622 = vmatprep.subr.mxu0 %v565
    %623 = vmatpush1.msra.mxu0 %v564
    %624 = vmatprep.subr.mxu0 %v563
    %625 = vmatpush1.msra.mxu0 %v562
    %626 = vmatprep.subr.mxu0 0.0
    %627 = vmatpush2.msra.mxu0 0.0
    %628 = vmatprep.subr.mxu0 0.0
    %629 = vmatpush2.msra.mxu0 0.0
    %630 = vmatprep.subr.mxu0 0.0
    %631 = vmatpush2.msra.mxu0 0.0
    %632 = vmatprep.subr.mxu0 0.0
    %633 = vmatpush2.msra.mxu0 0.0
    %634 = vmatprep.subr.mxu0 0.0
    %635 = vmatpush2.msra.mxu0 0.0
    %636 = vmatprep.subr.mxu0 0.0
    %637 = vmatpush2.msra.mxu0 0.0
    %638 = vmatprep.subr.mxu0 0.0
    %639 = vmatpush2.msra.mxu0 0.0
    %640 = vmatprep.subr.mxu0 0.0
    %641 = vmatpush2.msra.mxu0 0.0
    %642 = vmatprep.subr.mxu0 0.0
    %643 = vmatpush2.msra.mxu0 0.0
    %644 = vmatprep.subr.mxu0 0.0
    %645 = vmatpush2.msra.mxu0 0.0
    %646 = vmatprep.subr.mxu0 0.0
    %647 = vmatpush2.msra.mxu0 0.0
    %648 = vmatprep.subr.mxu0 0.0
    %649 = vmatpush2.msra.mxu0 0.0
    %650 = vmatprep.subr.mxu0 0.0
    %651 = vmatpush2.msra.mxu0 0.0
    %652 = vmatprep.subr.mxu0 0.0
    %653 = vmatpush2.msra.mxu0 0.0
    %654 = vmatprep.subr.mxu0 0.0
    %655 = vmatpush2.msra.mxu0 0.0
    %656 = vmatprep.subr.mxu0 0.0
    %657 = vmatpush2.msra.mxu0 0.0
    %658 = vmatprep.mubr.f32.mxu0 0.0
    %659 = vmatmul.mubr.f32.gmra.mxu0 %v32
    %v660 = vpop.f32.mrf.mxu0
    %v661 = vadd.f32 0.0, %v660
    %v662 = vpop.f32.mrf.mxu0
    %v663 = vadd.f32 0.0, %v662
    %664 = vmatprep.mubr.f32.mxu0 0.0
    %665 = vmatmul.mubr.f32.gmra.mxu0 %v33
    %v666 = vpop.f32.mrf.mxu0
    %v667 = vadd.f32 0.0, %v666
    %v668 = vpop.f32.mrf.mxu0
    %v669 = vadd.f32 0.0, %v668
    %670 = vmatprep.mubr.f32.mxu0 0.0
    %671 = vmatmul.mubr.f32.gmra.mxu0 %v34
    %v672 = vpop.f32.mrf.mxu0
    %v673 = vadd.f32 0.0, %v672
    %v674 = vpop.f32.mrf.mxu0
    %v675 = vadd.f32 0.0, %v674
    %676 = vmatprep.mubr.f32.mxu0 0.0
    %677 = vmatmul.mubr.f32.gmra.mxu0 %v35
    %v678 = vpop.f32.mrf.mxu0
    %v679 = vadd.f32 0.0, %v678
    %v680 = vpop.f32.mrf.mxu0
    %v681 = vadd.f32 0.0, %v680
    %682 = vmatprep.mubr.f32.mxu0 0.0
    %683 = vmatmul.mubr.f32.gmra.mxu0 %v36
    %v684 = vpop.f32.mrf.mxu0
    %v685 = vadd.f32 0.0, %v684
    %v686 = vpop.f32.mrf.mxu0
    %v687 = vadd.f32 0.0, %v686
    %688 = vmatprep.mubr.f32.mxu0 0.0
    %689 = vmatmul.mubr.f32.gmra.mxu0 %v37
    %v690 = vpop.f32.mrf.mxu0
    %v691 = vadd.f32 0.0, %v690
    %v692 = vpop.f32.mrf.mxu0
    %v693 = vadd.f32 0.0, %v692
    %694 = vmatprep.mubr.f32.mxu0 0.0
    %695 = vmatmul.mubr.f32.gmra.mxu0 %v38
    %v696 = vpop.f32.mrf.mxu0
    %v697 = vadd.f32 0.0, %v696
    %v698 = vpop.f32.mrf.mxu0
    %v699 = vadd.f32 0.0, %v698
    %700 = vmatprep.mubr.f32.mxu0 0.0
    %701 = vmatmul.mubr.f32.gmra.mxu0 %v39
    %v702 = vpop.f32.mrf.mxu0
    %v703 = vadd.f32 0.0, %v702
    %v704 = vpop.f32.mrf.mxu0
    %v705 = vadd.f32 0.0, %v704
    %706 = vmatprep.mubr.f32.mxu0 0.0
    %707 = vmatmul.mubr.f32.gmra.mxu0 %v40
    %v708 = vpop.f32.mrf.mxu0
    %v709 = vadd.f32 0.0, %v708
    %v710 = vpop.f32.mrf.mxu0
    %v711 = vadd.f32 0.0, %v710
    %712 = vmatprep.mubr.f32.mxu0 0.0
    %713 = vmatmul.mubr.f32.gmra.mxu0 %v41
    %v714 = vpop.f32.mrf.mxu0
    %v715 = vadd.f32 0.0, %v714
    %v716 = vpop.f32.mrf.mxu0
    %v717 = vadd.f32 0.0, %v716
    %718 = vmatprep.mubr.f32.mxu0 0.0
    %719 = vmatmul.mubr.f32.gmra.mxu0 %v42
    %v720 = vpop.f32.mrf.mxu0
    %v721 = vadd.f32 0.0, %v720
    %v722 = vpop.f32.mrf.mxu0
    %v723 = vadd.f32 0.0, %v722
    %724 = vmatprep.mubr.f32.mxu0 0.0
    %725 = vmatmul.mubr.f32.gmra.mxu0 %v43
    %v726 = vpop.f32.mrf.mxu0
    %v727 = vadd.f32 0.0, %v726
    %v728 = vpop.f32.mrf.mxu0
    %v729 = vadd.f32 0.0, %v728
    %730 = vmatprep.mubr.f32.mxu0 0.0
    %731 = vmatmul.mubr.f32.gmra.mxu0 %v44
    %v732 = vpop.f32.mrf.mxu0
    %v733 = vadd.f32 0.0, %v732
    %v734 = vpop.f32.mrf.mxu0
    %v735 = vadd.f32 0.0, %v734
    %736 = vmatprep.mubr.f32.mxu0 0.0
    %737 = vmatmul.mubr.f32.gmra.mxu0 %v45
    %v738 = vpop.f32.mrf.mxu0
    %v739 = vadd.f32 0.0, %v738
    %v740 = vpop.f32.mrf.mxu0
    %v741 = vadd.f32 0.0, %v740
    %742 = vmatprep.mubr.f32.mxu0 0.0
    %743 = vmatmul.mubr.f32.gmra.mxu0 %v46
    %v744 = vpop.f32.mrf.mxu0
    %v745 = vadd.f32 0.0, %v744
    %v746 = vpop.f32.mrf.mxu0
    %v747 = vadd.f32 0.0, %v746
    %748 = vmatprep.mubr.f32.mxu0 0.0
    %749 = vmatmul.mubr.f32.gmra.mxu0 %v47
    %v750 = vpop.f32.mrf.mxu0
    %v751 = vadd.f32 0.0, %v750
    %v752 = vpop.f32.mrf.mxu0
    %v753 = vadd.f32 0.0, %v752
    %754 = vdwg.mxu0
    %v755 = vmul.f32 %v661, %v276
    %v756 = vmul.f32 %v663, %v276
    %v757 = vmul.f32 %v667, %v281
    %v758 = vmul.f32 %v669, %v281
    %v759 = vmul.f32 %v673, %v286
    %v760 = vmul.f32 %v675, %v286
    %v761 = vmul.f32 %v679, %v291
    %v762 = vmul.f32 %v681, %v291
    %v763 = vmul.f32 %v685, %v296
    %v764 = vmul.f32 %v687, %v296
    %v765 = vmul.f32 %v691, %v301
    %v766 = vmul.f32 %v693, %v301
    %v767 = vmul.f32 %v697, %v306
    %v768 = vmul.f32 %v699, %v306
    %v769 = vmul.f32 %v703, %v311
    %v770 = vmul.f32 %v705, %v311
    %v771 = vmul.f32 %v709, %v316
    %v772 = vmul.f32 %v711, %v316
    %v773 = vmul.f32 %v715, %v321
    %v774 = vmul.f32 %v717, %v321
    %v775 = vmul.f32 %v721, %v326
    %v776 = vmul.f32 %v723, %v326
    %v777 = vmul.f32 %v727, %v331
    %v778 = vmul.f32 %v729, %v331
    %v779 = vmul.f32 %v733, %v336
    %v780 = vmul.f32 %v735, %v336
    %v781 = vmul.f32 %v739, %v341
    %v782 = vmul.f32 %v741, %v341
    %v783 = vmul.f32 %v745, %v346
    %v784 = vmul.f32 %v747, %v346
    %v785 = vmul.f32 %v751, %v351
    %v786 = vmul.f32 %v753, %v351
    %v787 = vadd.f32 %v755, %v388
    %v788 = vadd.f32 %v756, %v388
    %v789 = vadd.f32 %v757, %v393
    %v790 = vadd.f32 %v758, %v393
    %v791 = vadd.f32 %v759, %v398
    %v792 = vadd.f32 %v760, %v398
    %v793 = vadd.f32 %v761, %v403
    %v794 = vadd.f32 %v762, %v403
    %v795 = vadd.f32 %v763, %v408
    %v796 = vadd.f32 %v764, %v408
    %v797 = vadd.f32 %v765, %v413
    %v798 = vadd.f32 %v766, %v413
    %v799 = vadd.f32 %v767, %v418
    %v800 = vadd.f32 %v768, %v418
    %v801 = vadd.f32 %v769, %v423
    %v802 = vadd.f32 %v770, %v423
    %v803 = vadd.f32 %v771, %v428
    %v804 = vadd.f32 %v772, %v428
    %v805 = vadd.f32 %v773, %v433
    %v806 = vadd.f32 %v774, %v433
    %v807 = vadd.f32 %v775, %v438
    %v808 = vadd.f32 %v776, %v438
    %v809 = vadd.f32 %v777, %v443
    %v810 = vadd.f32 %v778, %v443
    %v811 = vadd.f32 %v779, %v448
    %v812 = vadd.f32 %v780, %v448
    %v813 = vadd.f32 %v781, %v453
    %v814 = vadd.f32 %v782, %v453
    %v815 = vadd.f32 %v783, %v458
    %v816 = vadd.f32 %v784, %v458
    %v817 = vadd.f32 %v785, %v463
    %v818 = vadd.f32 %v786, %v463
    %v819 = vmax.f32 %v787, 0.0
    %v820 = vmax.f32 %v788, 0.0
    %v821 = vmax.f32 %v789, 0.0
    %v822 = vmax.f32 %v790, 0.0
    %v823 = vmax.f32 %v791, 0.0
    %v824 = vmax.f32 %v792, 0.0
    %v825 = vmax.f32 %v793, 0.0
    %v826 = vmax.f32 %v794, 0.0
    %v827 = vmax.f32 %v795, 0.0
    %v828 = vmax.f32 %v796, 0.0
    %v829 = vmax.f32 %v797, 0.0
    %v830 = vmax.f32 %v798, 0.0
    %v831 = vmax.f32 %v799, 0.0
    %v832 = vmax.f32 %v800, 0.0
    %v833 = vmax.f32 %v801, 0.0
    %v834 = vmax.f32 %v802, 0.0
    %v835 = vmax.f32 %v803, 0.0
    %v836 = vmax.f32 %v804, 0.0
    %v837 = vmax.f32 %v805, 0.0
    %v838 = vmax.f32 %v806, 0.0
    %v839 = vmax.f32 %v807, 0.0
    %v840 = vmax.f32 %v808, 0.0
    %v841 = vmax.f32 %v809, 0.0
    %v842 = vmax.f32 %v810, 0.0
    %v843 = vmax.f32 %v811, 0.0
    %v844 = vmax.f32 %v812, 0.0
    %v845 = vmax.f32 %v813, 0.0
    %v846 = vmax.f32 %v814, 0.0
    %v847 = vmax.f32 %v815, 0.0
    %v848 = vmax.f32 %v816, 0.0
    %v849 = vmax.f32 %v817, 0.0
    %v850 = vmax.f32 %v818, 0.0
    %s851 = scalar_lea.vmem [#allocation5], 256
    %852 = vst [vmem:[%s851] sm:$0xff] %v819
    %853 = vst [vmem:[%s851 + $0x8] sm:$0xff] %v820
    %854 = vst [vmem:[%s851 + $0x10] sm:$0xff] %v821
    %855 = vst [vmem:[%s851 + $0x18] sm:$0xff] %v822
    %856 = vst [vmem:[%s851 + $0x20] sm:$0xff] %v823
    %857 = vst [vmem:[%s851 + $0x28] sm:$0xff] %v824
    %858 = vst [vmem:[%s851 + $0x30] sm:$0xff] %v825
    %859 = vst [vmem:[%s851 + $0x38] sm:$0xff] %v826
    %860 = vst [vmem:[%s851 + $0x40] sm:$0xff] %v827
    %861 = vst [vmem:[%s851 + $0x48] sm:$0xff] %v828
    %862 = vst [vmem:[%s851 + $0x50] sm:$0xff] %v829
    %863 = vst [vmem:[%s851 + $0x58] sm:$0xff] %v830
    %864 = vst [vmem:[%s851 + $0x60] sm:$0xff] %v831
    %865 = vst [vmem:[%s851 + $0x68] sm:$0xff] %v832
    %866 = vst [vmem:[%s851 + $0x70] sm:$0xff] %v833
    %867 = vst [vmem:[%s851 + $0x78] sm:$0xff] %v834
    %868 = vst [vmem:[%s851 + $0x80] sm:$0xff] %v835
    %869 = vst [vmem:[%s851 + $0x88] sm:$0xff] %v836
    %870 = vst [vmem:[%s851 + $0x90] sm:$0xff] %v837
    %871 = vst [vmem:[%s851 + $0x98] sm:$0xff] %v838
    %872 = vst [vmem:[%s851 + $0xa0] sm:$0xff] %v839
    %873 = vst [vmem:[%s851 + $0xa8] sm:$0xff] %v840
    %874 = vst [vmem:[%s851 + $0xb0] sm:$0xff] %v841
    %875 = vst [vmem:[%s851 + $0xb8] sm:$0xff] %v842
    %876 = vst [vmem:[%s851 + $0xc0] sm:$0xff] %v843
    %877 = vst [vmem:[%s851 + $0xc8] sm:$0xff] %v844
    %878 = vst [vmem:[%s851 + $0xd0] sm:$0xff] %v845
    %879 = vst [vmem:[%s851 + $0xd8] sm:$0xff] %v846
    %880 = vst [vmem:[%s851 + $0xe0] sm:$0xff] %v847
    %881 = vst [vmem:[%s851 + $0xe8] sm:$0xff] %v848
    %882 = vst [vmem:[%s851 + $0xf0] sm:$0xff] %v849
    %883 = vst [vmem:[%s851 + $0xf8] sm:$0xff] %v850
    // Predicated region
    $region22: #{tpu_custom_call.1} parent=1 // pred_check
      _
    $region23: #{tpu_custom_call.1} parent=1 // pred_check_branch
      %885 = sbr.rel (0) target = $region25
    $region24: #{tpu_custom_call.1} parent=1 // pred_region
      %s887 = ssub.s32 8192, 8192
      %888 = vsyncadd [#allocation4], %s887
      %s889 = sshll.u32 [#allocation5], 4
      %s890 = int_to_ptr.vmem [resolvable:$true] %s889
      %895 = dma.vmem_to_hbm [thread:$0]  %s890, 8192, %s4, [#allocation4], 256, 256, 16
    $region25: #{tpu_custom_call.1} parent=1 // pred_fallthru
      _
    // Predicated region
    $region26: #{tpu_custom_call.1} parent=1 // pred_check
      _
    $region27: #{tpu_custom_call.1} parent=1 // pred_check_branch
      %897 = sbr.rel (0) target = $region29
    $region28: #{tpu_custom_call.1} parent=1 // pred_region
      %898 = dma.done [#allocation4], 8192
    $region29: #{tpu_custom_call.1} parent=1 // pred_fallthru
      _
    %899 = vsyncpa [#allocation3], 1
    %900 = vsyncpa [#allocation4], 1

</llo_original>
